<compile_context>
chip_gen: v7x
topology: tpu7x:2x2x1
jax: 0.10.0
libtpu: 0.0.40
codegen_flags: <defaults>
</compile_context>

<pallas_src>
import functools
import math

import jax
import jax.numpy as jnp
from jax.experimental import pallas as pl
from jax.experimental.pallas import tpu as pltpu

LANE = 128      # TPU lane width
SUBLANE = 8     # TPU sublane count (f32)


def _pad_to_multiple(x, mult, axis):
    size = x.shape[axis]
    pad = (-size) % mult
    if pad == 0:
        return x
    widths = [(0, 0)] * x.ndim
    widths[axis] = (0, pad)
    return jnp.pad(x, widths)


def _pick_row_block(rows, batch, max_rows=512):
    """Row-block size that divides `rows`, is a multiple of `batch` (so the
    per-batch condition tile repeats cleanly inside a block) and of 8
    (sublane alignment) whenever it is not the full extent."""
    if rows <= max_rows:
        return rows
    step = batch * SUBLANE // math.gcd(batch, SUBLANE)
    best = rows  # fallback: one big block
    for cand in range(step, max_rows + 1, step):
        if rows % cand == 0:
            best = cand
    return best


# ----------------------------------------------------------------------------
# Kernel A (secondary path): lane-dense materialized channel concat with the
# condition broadcast over time.  Needed only if the real injected model
# consumes the NCHW concat directly.
# ----------------------------------------------------------------------------
def _concat_kernel(obs_ref, cond_ref, out_ref, *, d_obs, reps):
    # obs_ref : (R, d_obs)           lane-dense obs slab for this row block
    # cond_ref: (B, d_cond)          full condition, constant across the grid
    # out_ref : (R, d_obs + d_cond)  lane-dense output slab
    out_ref[:, :d_obs] = obs_ref[...]           # 768-lane aligned dense store
    c = cond_ref[...]
    if reps > 1:
        c = jnp.tile(c, (reps, 1))              # replicate B rows to R rows
    out_ref[:, d_obs:] = c                      # 256-lane aligned dense store


def condition_concat(obs, cond, *, max_rows_per_block=512):
    """obs: (T,B,C,H,W), cond: (1,B,Cc,H,W) -> (T,B,C+Cc,H,W)."""
    T, B, C, H, W = obs.shape
    one, Bc, Cc, Hc, Wc = cond.shape
    assert one == 1 and (Bc, Hc, Wc) == (B, H, W)
    cond = cond.astype(obs.dtype)               # robustness: match obs dtype
    HW = H * W
    d_obs, d_cond = C * HW, Cc * HW
    rows = T * B

    R = _pick_row_block(rows, B, max_rows_per_block)
    reps = R // B

    obs2 = obs.reshape(rows, d_obs)             # free reshape (contiguous)
    cond2 = cond.reshape(B, d_cond)

    out = pl.pallas_call(
        functools.partial(_concat_kernel, d_obs=d_obs, reps=reps),
        out_shape=jax.ShapeDtypeStruct((rows, d_obs + d_cond), obs.dtype),
        grid=(rows // R,),
        in_specs=[
            pl.BlockSpec((R, d_obs), lambda i: (i, 0)),
            # constant block index -> condition is DMA'd into VMEM only once
            pl.BlockSpec((B, d_cond), lambda i: (0, 0)),
        ],
        out_specs=pl.BlockSpec((R, d_obs + d_cond), lambda i: (i, 0)),
        compiler_params=pltpu.CompilerParams(
            dimension_semantics=("parallel",)),
    )(obs2, cond2)
    return out.reshape(T, B, C + Cc, H, W)


# ----------------------------------------------------------------------------
# Kernels B + C (primary path): concat fused into the split-weight linear head.
# ----------------------------------------------------------------------------
def _cond_head_kernel(c_ref, w_ref, b_ref, o_ref):
    # (B, Dc) @ (Dc, Fpad) + (1, Fpad) -> (B, Fpad); once per batch row.
    o_ref[...] = (
        jnp.dot(c_ref[...], w_ref[...], preferred_element_type=jnp.float32)
        + b_ref[...]
    )


def _obs_head_kernel(obs_ref, w_ref, cadd_ref, o_ref):
    # obs_ref : (R, D_obs) row block; w_ref: (D_obs, Fpad) resident;
    # cadd_ref: (R, Fpad) condition contribution (constant across the grid).
    # TODO(synk): for large D_obs (real frames) add a K-tiled grid axis
    # ("arbitrary") with an f32 VMEM accumulator init/finalized via pl.when.
    o_ref[...] = (
        jnp.dot(obs_ref[...], w_ref[...], preferred_element_type=jnp.float32)
        + cadd_ref[...]
    )


def fused_condition_head(obs, cond, w_obs, w_cond, bias, *,
                         max_rows_per_block=512):
    """Equivalent to linear(cat([obs, cond.repeat(T)], dim=2).flatten(2..)),
    without ever materializing the concatenated activation in HBM."""
    T, B, C, H, W = obs.shape
    one, Bc, Cc, Hc, Wc = cond.shape
    assert one == 1 and (Bc, Hc, Wc) == (B, H, W)
    d_obs, d_cond = C * H * W, Cc * H * W
    f_pad = w_obs.shape[1]
    assert w_obs.shape == (d_obs, f_pad)
    assert w_cond.shape == (d_cond, f_pad)
    assert f_pad % LANE == 0                      # lane-dense output width

    rows = T * B
    R = _pick_row_block(rows, B, max_rows_per_block)
    reps = R // B

    obs_flat = obs.reshape(rows, d_obs)           # free reshape (contiguous)
    cond_flat = cond.astype(obs.dtype).reshape(B, d_cond)

    vmem = pl.BlockSpec(memory_space=pltpu.MemorySpace.VMEM)

    # (1) condition contribution + bias: computed once per batch row.
    cond_add = pl.pallas_call(
        _cond_head_kernel,
        out_shape=jax.ShapeDtypeStruct((B, f_pad), jnp.float32),
        in_specs=[vmem, vmem, vmem],
        out_specs=vmem,
    )(cond_flat, w_cond, bias)

    # Replicate the tiny (B, 128) contribution to one row-block height so the
    # main kernel's add is a plain dense vreg op (no in-kernel relayout).
    cond_add_blk = jnp.tile(cond_add, (reps, 1)) if reps > 1 else cond_add

    # (2) obs matmul over lane/sublane-dense row blocks.  w_obs and the
    # condition contribution have constant block indices, so they are DMA'd
    # into VMEM once and stay resident across the whole grid.
    out = pl.pallas_call(
        _obs_head_kernel,
        out_shape=jax.ShapeDtypeStruct((rows, f_pad), jnp.float32),
        grid=(rows // R,),
        in_specs=[
            pl.BlockSpec((R, d_obs), lambda i: (i, 0)),
            pl.BlockSpec((d_obs, f_pad), lambda i: (0, 0)),
            pl.BlockSpec((R, f_pad), lambda i: (0, 0)),
        ],
        out_specs=pl.BlockSpec((R, f_pad), lambda i: (i, 0)),
        compiler_params=pltpu.CompilerParams(
            dimension_semantics=("parallel",)),
    )(obs_flat, w_obs, cond_add_blk)
    return out.reshape(T, B, f_pad)


# ----------------------------------------------------------------------------
# Stand-in for the injected `model`.
# TODO(synk): the wrapped self.model is an arbitrary injected nn.Module; a
# deterministic linear policy head is used here in its place.
# ----------------------------------------------------------------------------
def make_model_params(c_obs, c_cond, h, w, num_actions, key):
    d_obs, d_cond = c_obs * h * w, c_cond * h * w
    f = num_actions + 1
    kw, kb = jax.random.split(key)
    w_full = jax.random.normal(kw, (d_obs + d_cond, f), jnp.float32) * 0.02
    b_full = jax.random.normal(kb, (1, f), jnp.float32) * 0.01
    # Pad the output width to a lane-dense 128 so stores are unmasked.
    w_pad = _pad_to_multiple(w_full, LANE, axis=1)
    b_pad = _pad_to_multiple(b_full, LANE, axis=1)
    return {
        "w_obs": w_pad[:d_obs],      # (D_obs, 128)
        "w_cond": w_pad[d_obs:],     # (D_cond, 128)
        "bias": b_pad,               # (1, 128)
        "w_full": w_full,            # unpadded, for the pure-JAX reference
        "b_full": b_full,
        "num_actions": num_actions,
    }


# ----------------------------------------------------------------------------
# Condition.forward equivalent.
# ----------------------------------------------------------------------------
def condition_forward(params, inputs, core_state):
    obs = inputs["obs"]               # (T, B, C, H, W)
    condition = inputs["condition"]   # (1, B, Cc, H, W)
    out = fused_condition_head(
        obs, condition, params["w_obs"], params["w_cond"], params["bias"]
    )                                 # (T, B, 128) f32
    na = params["num_actions"]
    policy_logits = out[..., :na]     # (T, B, na)
    baseline = out[..., na]           # (T, B)
    return (policy_logits, baseline), core_state


if __name__ == "__main__":
    # Small shapes consistent with the forward pass.
    T, B, C, Cc, H, W = 8, 2, 3, 1, 16, 16
    num_actions = 6

    key = jax.random.PRNGKey(0)
    k_obs, k_cond, k_params = jax.random.split(key, 3)

    obs = jax.random.normal(k_obs, (T, B, C, H, W), jnp.float32)
    condition = jax.random.normal(k_cond, (1, B, Cc, H, W), jnp.float32)
    params = make_model_params(C, Cc, H, W, num_actions, k_params)
    core_state = (jnp.zeros((B, 32), jnp.float32),)

    inputs = {"obs": obs, "condition": condition}
    (logits, baseline), out_state = condition_forward(params, inputs, core_state)

    # Also exercise the materialized-concat kernel (used when the wrapped
    # model is a real NCHW network that cannot be weight-fused).
    x_cat = condition_concat(obs, condition)
    jax.block_until_ready((logits, baseline, x_cat))

    # Pure-JAX reference for the same semantics.
    x_ref = jnp.concatenate(
        [obs, jnp.broadcast_to(condition, (T, B, Cc, H, W))], axis=2
    )
    ref = x_ref.reshape(T * B, -1) @ params["w_full"] + params["b_full"]
    ref_logits = ref[:, :num_actions].reshape(T, B, num_actions)
    ref_baseline = ref[:, num_actions].reshape(T, B)

    assert logits.shape == (T, B, num_actions)
    assert baseline.shape == (T, B)
    assert jnp.allclose(x_cat, x_ref)
    assert jnp.allclose(logits, ref_logits, atol=5e-4, rtol=5e-4)
    assert jnp.allclose(baseline, ref_baseline, atol=5e-4, rtol=5e-4)

    print("KERNEL_OK")
</pallas_src>

<mosaic_0001>
module attributes {stable_mosaic.version = 11 : i64} {
  func.func @_cond_head_kernel(%arg0: memref<2x256xf32, #tpu.memory_space<vmem>>, %arg1: memref<256x128xf32, #tpu.memory_space<vmem>>, %arg2: memref<1x128xf32, #tpu.memory_space<vmem>>, %arg3: memref<2x128xf32, #tpu.memory_space<vmem>>) attributes {dimension_semantics = [], scalar_prefetch = 0 : i64, scratch_operands = 0 : i64, tpu.core_type = #tpu.core_type<tc>} {
    %c0 = arith.constant 0 : index
    %c0_0 = arith.constant 0 : index
    %0 = vector.load %arg0[%c0, %c0_0] : memref<2x256xf32, #tpu.memory_space<vmem>>, vector<2x256xf32>
    %c0_1 = arith.constant 0 : index
    %c0_2 = arith.constant 0 : index
    %1 = vector.load %arg1[%c0_1, %c0_2] : memref<256x128xf32, #tpu.memory_space<vmem>>, vector<256x128xf32>
    %cst = arith.constant dense<0.000000e+00> : vector<2x128xf32>
    %2 = tpu.matmul %0, %1, %cst {dimension_numbers = #tpu.dot_dimension_numbers<[1], [0], [0], [1], [0, 0, 1, 1], [], []>} : vector<2x256xf32>, vector<256x128xf32>, vector<2x128xf32> -> vector<2x128xf32>
    %c0_3 = arith.constant 0 : index
    %c0_4 = arith.constant 0 : index
    %3 = vector.load %arg2[%c0_3, %c0_4] : memref<1x128xf32, #tpu.memory_space<vmem>>, vector<1x128xf32>
    %4 = vector.broadcast %3 : vector<1x128xf32> to vector<2x128xf32>
    %5 = arith.addf %2, %4 : vector<2x128xf32>
    %c0_5 = arith.constant 0 : index
    %c0_6 = arith.constant 0 : index
    %6 = vector.load %arg3[%c0_5, %c0_6] : memref<2x128xf32, #tpu.memory_space<vmem>>, vector<2x128xf32>
    tpu.vector_store %arg3[%c0_5, %c0_6], %5 {strides = array<i32>} : memref<2x128xf32, #tpu.memory_space<vmem>>, vector<2x128xf32>,
    return
  }
}

</mosaic_0001>

<llo_original>
// kernel: tpu_custom_call.1
$region0: #{tpu_custom_call.1}
  #allocation0 [shape = 'u32[]', space=smem, size = 0x4, offset = 0x4, fixed_abs, tag = 'smem constant byte address 0x4 - core index']
  #allocation1 [shape = 'u32[144,128]{1,0:T(1,128)}', space=vmem, size = 0x12000, scoped, tag = 'internal scratch']
  %s0 = inlined_call_operand.hbm [shape: f32[2,256], index: 0, kind: input, shape index: {}]
  %s1 = inlined_call_operand.hbm [shape: f32[256,128], index: 1, kind: input, shape index: {}]
  %s2 = inlined_call_operand.vmem [shape: f32[1,128], index: 2, kind: input, shape index: {}]
  %s3 = inlined_call_operand.hbm [shape: f32[2,128], index: 3, kind: output, shape index: {}]
  %s4 = sld [smem:[#allocation0]]
  $region30: #{tpu_custom_call.1} parent=0
    _
  %s6 = ssub.s32 1, %s4
  %s7 = scalar_select 0, %s6, %s4
  $region1: #{tpu_custom_call.1} parent=0
    #allocation2 [shape = 'u8[2048]{0}', space=vmem, size = 0x800, scoped, tag = 'input window, operand 0, single buffered']
    #allocation3 [shape = 's32[1]{0}', space=sflag, size = 0x4, scoped, tag = 'scoped memory for tpu_custom_call.1']
    #allocation4 [shape = 's32[1]{0}', space=sflag, size = 0x4, scoped, tag = 'scoped memory for tpu_custom_call.1']
    #allocation5 [shape = 'u8[131072]{0}', space=vmem, size = 0x20000, scoped, tag = 'input window, operand 1, single buffered']
    #allocation6 [shape = 's32[1]{0}', space=sflag, size = 0x4, scoped, tag = 'scoped memory for tpu_custom_call.1']
    #allocation7 [shape = 'u8[1024]{0}', space=vmem, size = 0x400, scoped, tag = 'output window, operand 0, single buffered']
    %8 = vsyncpa [#allocation3], 0
    %9 = vsyncpa [#allocation6], 0
    %10 = vsyncpa [#allocation4], 0
    // Predicated region
    $region2: #{tpu_custom_call.1} parent=1 // pred_check
      _
    $region3: #{tpu_custom_call.1} parent=1 // pred_check_branch
      %12 = sbr.rel (0) target = $region5
    $region4: #{tpu_custom_call.1} parent=1 // pred_region
      %s14 = ssub.s32 64, 64
      %15 = vsyncadd [#allocation3], %s14
      %s17 = sshll.u32 [#allocation2], 4
      %s18 = int_to_ptr.vmem [resolvable:$true] %s17
      %20 = dma.hbm_to_vmem [thread:$0]  %s0, 64, %s18, [#allocation3]
    $region5: #{tpu_custom_call.1} parent=1 // pred_fallthru
      _
    // Predicated region
    $region6: #{tpu_custom_call.1} parent=1 // pred_check
      _
    $region7: #{tpu_custom_call.1} parent=1 // pred_check_branch
      %22 = sbr.rel (0) target = $region9
    $region8: #{tpu_custom_call.1} parent=1 // pred_region
      %s24 = ssub.s32 4096, 4096
      %25 = vsyncadd [#allocation6], %s24
      %s26 = sshll.u32 [#allocation5], 4
      %s27 = int_to_ptr.vmem [resolvable:$true] %s26
      %32 = dma.hbm_to_vmem [thread:$0]  %s1, 4096, %s27, [#allocation6], 128, 128, 8
    $region9: #{tpu_custom_call.1} parent=1 // pred_fallthru
      _
    // Predicated region
    $region10: #{tpu_custom_call.1} parent=1 // pred_check
      _
    $region11: #{tpu_custom_call.1} parent=1 // pred_check_branch
      %34 = sbr.rel (0) target = $region13
    $region12: #{tpu_custom_call.1} parent=1 // pred_region
      _
    $region13: #{tpu_custom_call.1} parent=1 // pred_fallthru
      _
    // Predicated region
    $region14: #{tpu_custom_call.1} parent=1 // pred_check
      _
    $region15: #{tpu_custom_call.1} parent=1 // pred_check_branch
      %36 = sbr.rel (0) target = $region17
    $region16: #{tpu_custom_call.1} parent=1 // pred_region
      %37 = dma.done [#allocation3], 64
    $region17: #{tpu_custom_call.1} parent=1 // pred_fallthru
      _
    // Predicated region
    $region18: #{tpu_custom_call.1} parent=1 // pred_check
      _
    $region19: #{tpu_custom_call.1} parent=1 // pred_check_branch
      %39 = sbr.rel (0) target = $region21
    $region20: #{tpu_custom_call.1} parent=1 // pred_region
      %40 = dma.done [#allocation6], 4096
    $region21: #{tpu_custom_call.1} parent=1 // pred_fallthru
      _
    %v41 = vld [vmem:[#allocation2] sm:$0xf]
    %v42 = vld [vmem:[#allocation5] sm:$0xff]
    %v43 = vld [vmem:[#allocation5 + $0x8] sm:$0xff]
    %v44 = vld [vmem:[#allocation5 + $0x10] sm:$0xff]
    %v45 = vld [vmem:[#allocation5 + $0x18] sm:$0xff]
    %v46 = vld [vmem:[#allocation5 + $0x20] sm:$0xff]
    %v47 = vld [vmem:[#allocation5 + $0x28] sm:$0xff]
    %v48 = vld [vmem:[#allocation5 + $0x30] sm:$0xff]
    %v49 = vld [vmem:[#allocation5 + $0x38] sm:$0xff]
    %v50 = vld [vmem:[#allocation5 + $0x40] sm:$0xff]
    %v51 = vld [vmem:[#allocation5 + $0x48] sm:$0xff]
    %v52 = vld [vmem:[#allocation5 + $0x50] sm:$0xff]
    %v53 = vld [vmem:[#allocation5 + $0x58] sm:$0xff]
    %v54 = vld [vmem:[#allocation5 + $0x60] sm:$0xff]
    %v55 = vld [vmem:[#allocation5 + $0x68] sm:$0xff]
    %v56 = vld [vmem:[#allocation5 + $0x70] sm:$0xff]
    %v57 = vld [vmem:[#allocation5 + $0x78] sm:$0xff]
    %v58 = vld [vmem:[#allocation5 + $0x80] sm:$0xff]
    %v59 = vld [vmem:[#allocation5 + $0x88] sm:$0xff]
    %v60 = vld [vmem:[#allocation5 + $0x90] sm:$0xff]
    %v61 = vld [vmem:[#allocation5 + $0x98] sm:$0xff]
    %v62 = vld [vmem:[#allocation5 + $0xa0] sm:$0xff]
    %v63 = vld [vmem:[#allocation5 + $0xa8] sm:$0xff]
    %v64 = vld [vmem:[#allocation5 + $0xb0] sm:$0xff]
    %v65 = vld [vmem:[#allocation5 + $0xb8] sm:$0xff]
    %v66 = vld [vmem:[#allocation5 + $0xc0] sm:$0xff]
    %v67 = vld [vmem:[#allocation5 + $0xc8] sm:$0xff]
    %v68 = vld [vmem:[#allocation5 + $0xd0] sm:$0xff]
    %v69 = vld [vmem:[#allocation5 + $0xd8] sm:$0xff]
    %v70 = vld [vmem:[#allocation5 + $0xe0] sm:$0xff]
    %v71 = vld [vmem:[#allocation5 + $0xe8] sm:$0xff]
    %v72 = vld [vmem:[#allocation5 + $0xf0] sm:$0xff]
    %v73 = vld [vmem:[#allocation5 + $0xf8] sm:$0xff]
    %v74 = vld [vmem:[%s2] sm:$0x1]
    %v76 = vlaneseq
    %v77 = vshrl.u32 %v76, 7
    %v78 = vsub.s32 0, %v77
    %v79 = vrot.slane %v74, %v78
    %v83 = vunpack.c.l.s4 1983009808
    %v84 = vunpack.c.0.s8 %v83
    %v85 = vlaneseq
    %v86 = vshrl.u32 %v85, 7
    %v87 = vsub.s32 %v84, %v86
    %v88 = vrot.slane %v41, %v87
    %v89 = vcombine.high %v88, %v88
    %92 = vmatprep.subr.mxu0 0.0
    %93 = vmatpush1.msra.mxu0 %v42
    %94 = vmatprep.subr.mxu0 0.0
    %95 = vmatpush1.msra.mxu0 %v43
    %96 = vmatprep.subr.mxu0 0.0
    %97 = vmatpush1.msra.mxu0 %v44
    %98 = vmatprep.subr.mxu0 0.0
    %99 = vmatpush1.msra.mxu0 %v45
    %100 = vmatprep.subr.mxu0 0.0
    %101 = vmatpush1.msra.mxu0 %v46
    %102 = vmatprep.subr.mxu0 0.0
    %103 = vmatpush1.msra.mxu0 %v47
    %104 = vmatprep.subr.mxu0 0.0
    %105 = vmatpush1.msra.mxu0 %v48
    %106 = vmatprep.subr.mxu0 0.0
    %107 = vmatpush1.msra.mxu0 %v49
    %108 = vmatprep.subr.mxu0 0.0
    %109 = vmatpush1.msra.mxu0 %v50
    %110 = vmatprep.subr.mxu0 0.0
    %111 = vmatpush1.msra.mxu0 %v51
    %112 = vmatprep.subr.mxu0 0.0
    %113 = vmatpush1.msra.mxu0 %v52
    %114 = vmatprep.subr.mxu0 0.0
    %115 = vmatpush1.msra.mxu0 %v53
    %116 = vmatprep.subr.mxu0 0.0
    %117 = vmatpush1.msra.mxu0 %v54
    %118 = vmatprep.subr.mxu0 0.0
    %119 = vmatpush1.msra.mxu0 %v55
    %120 = vmatprep.subr.mxu0 0.0
    %121 = vmatpush1.msra.mxu0 %v56
    %122 = vmatprep.subr.mxu0 0.0
    %123 = vmatpush1.msra.mxu0 %v57
    %124 = vmatprep.subr.mxu0 0.0
    %125 = vmatpush1.msra.mxu0 %v58
    %126 = vmatprep.subr.mxu0 0.0
    %127 = vmatpush1.msra.mxu0 %v59
    %128 = vmatprep.subr.mxu0 0.0
    %129 = vmatpush1.msra.mxu0 %v60
    %130 = vmatprep.subr.mxu0 0.0
    %131 = vmatpush1.msra.mxu0 %v61
    %132 = vmatprep.subr.mxu0 0.0
    %133 = vmatpush1.msra.mxu0 %v62
    %134 = vmatprep.subr.mxu0 0.0
    %135 = vmatpush1.msra.mxu0 %v63
    %136 = vmatprep.subr.mxu0 0.0
    %137 = vmatpush1.msra.mxu0 %v64
    %138 = vmatprep.subr.mxu0 0.0
    %139 = vmatpush1.msra.mxu0 %v65
    %140 = vmatprep.subr.mxu0 0.0
    %141 = vmatpush1.msra.mxu0 %v66
    %142 = vmatprep.subr.mxu0 0.0
    %143 = vmatpush1.msra.mxu0 %v67
    %144 = vmatprep.subr.mxu0 0.0
    %145 = vmatpush1.msra.mxu0 %v68
    %146 = vmatprep.subr.mxu0 0.0
    %147 = vmatpush1.msra.mxu0 %v69
    %148 = vmatprep.subr.mxu0 0.0
    %149 = vmatpush1.msra.mxu0 %v70
    %150 = vmatprep.subr.mxu0 0.0
    %151 = vmatpush1.msra.mxu0 %v71
    %152 = vmatprep.subr.mxu0 0.0
    %153 = vmatpush1.msra.mxu0 %v72
    %154 = vmatprep.subr.mxu0 0.0
    %155 = vmatpush1.msra.mxu0 %v73
    %156 = vmatprep.mubr.f32.mxu0 %v89
    %157 = vmatmul.mubr.f32.gmra.mrb[0].mxu0 %v88
    %v158 = vpop.f32.mrb[0].mxu0
    %v159 = vadd.f32 %v79, %v158
    %v160 = vpop.f32.mrb[0].mxu0
    %161 = vdwg.mxu0
    %162 = vst [vmem:[#allocation7] sm:$0x3] %v159
    // Predicated region
    $region22: #{tpu_custom_call.1} parent=1 // pred_check
      _
    $region23: #{tpu_custom_call.1} parent=1 // pred_check_branch
      %164 = sbr.rel (0) target = $region25
    $region24: #{tpu_custom_call.1} parent=1 // pred_region
      %s166 = ssub.s32 32, 32
      %167 = vsyncadd [#allocation4], %s166
      %s169 = sshll.u32 [#allocation7], 4
      %s170 = int_to_ptr.vmem [resolvable:$true] %s169
      %172 = dma.vmem_to_hbm [thread:$0]  %s170, 32, %s3, [#allocation4]
    $region25: #{tpu_custom_call.1} parent=1 // pred_fallthru
      _
    // Predicated region
    $region26: #{tpu_custom_call.1} parent=1 // pred_check
      _
    $region27: #{tpu_custom_call.1} parent=1 // pred_check_branch
      %174 = sbr.rel (0) target = $region29
    $region28: #{tpu_custom_call.1} parent=1 // pred_region
      %175 = dma.done [#allocation4], 32
    $region29: #{tpu_custom_call.1} parent=1 // pred_fallthru
      _
    %176 = vsyncpa [#allocation3], 1
    %177 = vsyncpa [#allocation6], 1
    %178 = vsyncpa [#allocation4], 1

</llo_original>
